<compile_context>
chip_gen: v5e
topology: v5e:2x2
jax: 0.10.0
libtpu: 0.0.40
codegen_flags: <defaults>
</compile_context>

<pallas_src>
import functools

import jax
import jax.numpy as jnp
from jax.experimental import pallas as pl
from jax.experimental.pallas import tpu as pltpu

FEAT_PAD = 128          # lane-dense padded feature width
MAX_TILE_B = 512        # batch rows per grid step for large batches


def _round_up(x, m):
    return ((x + m - 1) // m) * m


def _simple_spatial_kernel(x12_ref, w12_ref, b12_ref, w4_ref, b4_ref,
                           w5_ref, b5_ref, out_ref, *, f_pad):
    # Fused linear1 + linear2 via block-diagonal weights: one MXU push.
    so = jnp.dot(x12_ref[...], w12_ref[...],
                 preferred_element_type=jnp.float32)          # (TB, 2*Fp) f32
    so = jnp.maximum(so + b12_ref[...], 0.0)                   # ReLU per half

    # fuse: subj half + obj half
    f = so[:, :f_pad] + so[:, f_pad:]                          # (TB, Fp) f32

    # linear4 -> ReLU
    f4 = jnp.dot(f.astype(w4_ref.dtype), w4_ref[...],
                 preferred_element_type=jnp.float32)
    f4 = jnp.maximum(f4 + b4_ref[...], 0.0)

    # dropout(p=0.5) in eval mode = identity

    # linear5
    out = jnp.dot(f4.astype(w5_ref.dtype), w5_ref[...],
                  preferred_element_type=jnp.float32)
    out_ref[...] = (out + b5_ref[...]).astype(out_ref.dtype)


def prepare_fused_params(params, input_dim, feature_dim, f_pad=FEAT_PAD):
    """Build block-diagonal / lane-padded bf16 weights (done once, outside the kernel)."""
    f32 = jnp.float32
    w1, b1 = params["w1"], params["b1"]
    w2, b2 = params["w2"], params["b2"]
    w4, b4 = params["w4"], params["b4"]
    w5, b5 = params["w5"], params["b5"]

    # block_diag(W1, W2), zero-padded to (2*in, 2*f_pad)
    w12 = jnp.zeros((2 * input_dim, 2 * f_pad), f32)
    w12 = w12.at[:input_dim, :feature_dim].set(w1)
    w12 = w12.at[input_dim:, f_pad:f_pad + feature_dim].set(w2)
    b12 = jnp.zeros((1, 2 * f_pad), f32)
    b12 = b12.at[:, :feature_dim].set(b1)
    b12 = b12.at[:, f_pad:f_pad + feature_dim].set(b2)

    def pad_sq(w, b):
        wp = jnp.zeros((f_pad, f_pad), f32).at[:feature_dim, :feature_dim].set(w)
        bp = jnp.zeros((1, f_pad), f32).at[:, :feature_dim].set(b)
        return wp, bp

    w4p, b4p = pad_sq(w4, b4)
    w5p, b5p = pad_sq(w5, b5)

    bf16 = jnp.bfloat16
    return dict(
        w12=w12.astype(bf16), b12=b12,            # biases stay f32
        w4=w4p.astype(bf16), b4=b4p,
        w5=w5p.astype(bf16), b5=b5p,
    )


def simple_spatial_forward(subj, obj, predi, fused, *, feature_dim,
                           f_pad=FEAT_PAD, max_tile_b=MAX_TILE_B):
    """fused: dict from prepare_fused_params. `predi` is unused in the reference forward."""
    del predi
    B, input_dim = subj.shape
    out_dtype = subj.dtype

    # Choose a batch tile: multiple of 8 sublanes, capped at max_tile_b.
    tile_b = min(max_tile_b, _round_up(B, 8))
    b_pad = _round_up(B, tile_b)

    # Concatenate [subj | obj] and zero-pad the batch; cast matmul operand to bf16.
    x12 = jnp.concatenate([subj, obj], axis=1)
    if b_pad != B:
        x12 = jnp.pad(x12, ((0, b_pad - B), (0, 0)))
    x12 = x12.astype(jnp.bfloat16)

    k12 = 2 * input_dim
    grid = (pl.cdiv(b_pad, tile_b),)

    const = lambda i: (0, 0)   # weights/biases resident across the batch grid
    in_specs = [
        pl.BlockSpec((tile_b, k12), lambda i: (i, 0)),     # x12 tile
        pl.BlockSpec((k12, 2 * f_pad), const),             # w12
        pl.BlockSpec((1, 2 * f_pad), const),               # b12
        pl.BlockSpec((f_pad, f_pad), const),               # w4
        pl.BlockSpec((1, f_pad), const),                   # b4
        pl.BlockSpec((f_pad, f_pad), const),               # w5
        pl.BlockSpec((1, f_pad), const),                   # b5
    ]
    out_spec = pl.BlockSpec((tile_b, f_pad), lambda i: (i, 0))

    flops = 2 * b_pad * (k12 * 2 * f_pad + f_pad * f_pad + f_pad * f_pad)
    bytes_accessed = (
        x12.size * x12.dtype.itemsize
        + b_pad * f_pad * jnp.dtype(out_dtype).itemsize
        + sum(int(v.size) * v.dtype.itemsize for v in fused.values())
    )

    kernel = functools.partial(_simple_spatial_kernel, f_pad=f_pad)
    out_padded = pl.pallas_call(
        kernel,
        out_shape=jax.ShapeDtypeStruct((b_pad, f_pad), out_dtype),
        grid=grid,
        in_specs=in_specs,
        out_specs=out_spec,
        compiler_params=pltpu.CompilerParams(
            dimension_semantics=("parallel",),
            vmem_limit_bytes=32 * 1024 * 1024,
        ),
        cost_estimate=pl.CostEstimate(
            flops=flops, transcendentals=0, bytes_accessed=bytes_accessed),
    )(x12, fused["w12"], fused["b12"], fused["w4"], fused["b4"],
      fused["w5"], fused["b5"])

    return out_padded[:B, :feature_dim]


def init_params(key, input_dim, feature_dim):
    """nn.Linear-style init (uniform +/- 1/sqrt(fan_in)); weights stored [in, out]."""
    ks = jax.random.split(key, 8)

    def lin(kw, kb, fan_in, fan_out):
        bound = 1.0 / jnp.sqrt(fan_in)
        w = jax.random.uniform(kw, (fan_in, fan_out), jnp.float32, -bound, bound)
        b = jax.random.uniform(kb, (1, fan_out), jnp.float32, -bound, bound)
        return w, b

    w1, b1 = lin(ks[0], ks[1], input_dim, feature_dim)
    w2, b2 = lin(ks[2], ks[3], input_dim, feature_dim)
    w4, b4 = lin(ks[4], ks[5], feature_dim, feature_dim)
    w5, b5 = lin(ks[6], ks[7], feature_dim, feature_dim)
    return dict(w1=w1, b1=b1, w2=w2, b2=b2, w4=w4, b4=b4, w5=w5, b5=b5)


def _reference_forward(subj, obj, p):
    s = jnp.maximum(subj @ p["w1"] + p["b1"], 0.0)
    o = jnp.maximum(obj @ p["w2"] + p["b2"], 0.0)
    f = s + o
    f = jnp.maximum(f @ p["w4"] + p["b4"], 0.0)
    return f @ p["w5"] + p["b5"]


if __name__ == "__main__":
    key = jax.random.PRNGKey(0)
    k_subj, k_obj, k_predi, k_params = jax.random.split(key, 4)

    batch = 8
    input_dim = 8
    feature_dim = 32
    predicate_dim = 16  # unused by forward, kept for interface parity

    subj = jax.random.normal(k_subj, (batch, input_dim), jnp.float32)
    obj = jax.random.normal(k_obj, (batch, input_dim), jnp.float32)
    predi = jax.random.normal(k_predi, (batch, predicate_dim), jnp.float32)

    params = init_params(k_params, input_dim, feature_dim)
    fused = prepare_fused_params(params, input_dim, feature_dim)

    out = simple_spatial_forward(subj, obj, predi, fused, feature_dim=feature_dim)
    out = jax.block_until_ready(out)

    ref = _reference_forward(subj, obj, params)
    assert out.shape == (batch, feature_dim)
    # bf16 matmul operands -> loosened tolerance vs the f32 reference.
    assert jnp.allclose(out, ref, atol=5e-2, rtol=5e-2), "mismatch vs reference"

    print("KERNEL_OK")
</pallas_src>

<mosaic_0001>
module attributes {stable_mosaic.version = 11 : i64} {
  func.func @_simple_spatial_kernel(%arg0: i32, %arg1: memref<8x16xbf16, #tpu.memory_space<vmem>>, %arg2: memref<16x256xbf16, #tpu.memory_space<vmem>>, %arg3: memref<1x256xf32, #tpu.memory_space<vmem>>, %arg4: memref<128x128xbf16, #tpu.memory_space<vmem>>, %arg5: memref<1x128xf32, #tpu.memory_space<vmem>>, %arg6: memref<128x128xbf16, #tpu.memory_space<vmem>>, %arg7: memref<1x128xf32, #tpu.memory_space<vmem>>, %arg8: memref<8x128xf32, #tpu.memory_space<vmem>>) attributes {dimension_semantics = [#tpu.dimension_semantics<parallel>], iteration_bounds = array<i64: 1>, scalar_prefetch = 0 : i64, scratch_operands = 0 : i64, tpu.core_type = #tpu.core_type<tc>, window_params = [{transform_indices = @transform_0, window_bounds = array<i64: 8, 16>}, {pipeline_mode = #tpu.pipeline_mode<synchronous>, transform_indices = @transform_1, window_bounds = array<i64: 16, 256>}, {pipeline_mode = #tpu.pipeline_mode<synchronous>, transform_indices = @transform_2, window_bounds = array<i64: 1, 256>}, {pipeline_mode = #tpu.pipeline_mode<synchronous>, transform_indices = @transform_3, window_bounds = array<i64: 128, 128>}, {pipeline_mode = #tpu.pipeline_mode<synchronous>, transform_indices = @transform_4, window_bounds = array<i64: 1, 128>}, {pipeline_mode = #tpu.pipeline_mode<synchronous>, transform_indices = @transform_5, window_bounds = array<i64: 128, 128>}, {pipeline_mode = #tpu.pipeline_mode<synchronous>, transform_indices = @transform_6, window_bounds = array<i64: 1, 128>}, {transform_indices = @transform_7, window_bounds = array<i64: 8, 128>}]} {
    %c0 = arith.constant 0 : index
    %c0_0 = arith.constant 0 : index
    %0 = vector.load %arg1[%c0, %c0_0] : memref<8x16xbf16, #tpu.memory_space<vmem>>, vector<8x16xbf16>
    %c0_1 = arith.constant 0 : index
    %c0_2 = arith.constant 0 : index
    %1 = vector.load %arg2[%c0_1, %c0_2] : memref<16x256xbf16, #tpu.memory_space<vmem>>, vector<16x256xbf16>
    %cst = arith.constant dense<0.000000e+00> : vector<8x256xf32>
    %2 = tpu.matmul %0, %1, %cst {dimension_numbers = #tpu.dot_dimension_numbers<[1], [0], [0], [1], [0, 0, 1, 1], [], []>} : vector<8x16xbf16>, vector<16x256xbf16>, vector<8x256xf32> -> vector<8x256xf32>
    %c0_3 = arith.constant 0 : index
    %c0_4 = arith.constant 0 : index
    %3 = vector.load %arg3[%c0_3, %c0_4] : memref<1x256xf32, #tpu.memory_space<vmem>>, vector<1x256xf32>
    %4 = vector.broadcast %3 : vector<1x256xf32> to vector<8x256xf32>
    %5 = arith.addf %2, %4 : vector<8x256xf32>
    %cst_5 = arith.constant 0.000000e+00 : f32
    %6 = vector.broadcast %cst_5 : f32 to vector<8x256xf32>
    %7 = arith.maximumf %5, %6 : vector<8x256xf32>
    %8 = vector.extract_strided_slice %7 {offsets = [0, 0], sizes = [8, 128], strides = [1, 1]} : vector<8x256xf32> to vector<8x128xf32>
    %9 = vector.extract_strided_slice %7 {offsets = [0, 128], sizes = [8, 128], strides = [1, 1]} : vector<8x256xf32> to vector<8x128xf32>
    %10 = arith.addf %8, %9 : vector<8x128xf32>
    %11 = arith.truncf %10 : vector<8x128xf32> to vector<8x128xbf16>
    %c0_6 = arith.constant 0 : index
    %c0_7 = arith.constant 0 : index
    %12 = vector.load %arg4[%c0_6, %c0_7] : memref<128x128xbf16, #tpu.memory_space<vmem>>, vector<128x128xbf16>
    %cst_8 = arith.constant dense<0.000000e+00> : vector<8x128xf32>
    %13 = tpu.matmul %11, %12, %cst_8 {dimension_numbers = #tpu.dot_dimension_numbers<[1], [0], [0], [1], [0, 0, 1, 1], [], []>} : vector<8x128xbf16>, vector<128x128xbf16>, vector<8x128xf32> -> vector<8x128xf32>
    %c0_9 = arith.constant 0 : index
    %c0_10 = arith.constant 0 : index
    %14 = vector.load %arg5[%c0_9, %c0_10] : memref<1x128xf32, #tpu.memory_space<vmem>>, vector<1x128xf32>
    %15 = vector.broadcast %14 : vector<1x128xf32> to vector<8x128xf32>
    %16 = arith.addf %13, %15 : vector<8x128xf32>
    %cst_11 = arith.constant 0.000000e+00 : f32
    %17 = vector.broadcast %cst_11 : f32 to vector<8x128xf32>
    %18 = arith.maximumf %16, %17 : vector<8x128xf32>
    %19 = arith.truncf %18 : vector<8x128xf32> to vector<8x128xbf16>
    %c0_12 = arith.constant 0 : index
    %c0_13 = arith.constant 0 : index
    %20 = vector.load %arg6[%c0_12, %c0_13] : memref<128x128xbf16, #tpu.memory_space<vmem>>, vector<128x128xbf16>
    %cst_14 = arith.constant dense<0.000000e+00> : vector<8x128xf32>
    %21 = tpu.matmul %19, %20, %cst_14 {dimension_numbers = #tpu.dot_dimension_numbers<[1], [0], [0], [1], [0, 0, 1, 1], [], []>} : vector<8x128xbf16>, vector<128x128xbf16>, vector<8x128xf32> -> vector<8x128xf32>
    %c0_15 = arith.constant 0 : index
    %c0_16 = arith.constant 0 : index
    %22 = vector.load %arg7[%c0_15, %c0_16] : memref<1x128xf32, #tpu.memory_space<vmem>>, vector<1x128xf32>
    %23 = vector.broadcast %22 : vector<1x128xf32> to vector<8x128xf32>
    %24 = arith.addf %21, %23 : vector<8x128xf32>
    %c0_17 = arith.constant 0 : index
    %c0_18 = arith.constant 0 : index
    %25 = vector.load %arg8[%c0_17, %c0_18] : memref<8x128xf32, #tpu.memory_space<vmem>>, vector<8x128xf32>
    tpu.vector_store %arg8[%c0_17, %c0_18], %24 {strides = array<i32>} : memref<8x128xf32, #tpu.memory_space<vmem>>, vector<8x128xf32>,
    return
  }
  func.func @transform_0(%arg0: i32) -> (i32, i32) {
    %c0_i32 = arith.constant 0 : i32
    %c0_i32_0 = arith.constant 0 : i32
    return %arg0, %c0_i32 : i32, i32
  }
  func.func @transform_1(%arg0: i32) -> (i32, i32) {
    %c0_i32 = arith.constant 0 : i32
    %c0_i32_0 = arith.constant 0 : i32
    %c0_i32_1 = arith.constant 0 : i32
    return %c0_i32, %c0_i32_0 : i32, i32
  }
  func.func @transform_2(%arg0: i32) -> (i32, i32) {
    %c0_i32 = arith.constant 0 : i32
    %c0_i32_0 = arith.constant 0 : i32
    %c0_i32_1 = arith.constant 0 : i32
    return %c0_i32, %c0_i32_0 : i32, i32
  }
  func.func @transform_3(%arg0: i32) -> (i32, i32) {
    %c0_i32 = arith.constant 0 : i32
    %c0_i32_0 = arith.constant 0 : i32
    %c0_i32_1 = arith.constant 0 : i32
    return %c0_i32, %c0_i32_0 : i32, i32
  }
  func.func @transform_4(%arg0: i32) -> (i32, i32) {
    %c0_i32 = arith.constant 0 : i32
    %c0_i32_0 = arith.constant 0 : i32
    %c0_i32_1 = arith.constant 0 : i32
    return %c0_i32, %c0_i32_0 : i32, i32
  }
  func.func @transform_5(%arg0: i32) -> (i32, i32) {
    %c0_i32 = arith.constant 0 : i32
    %c0_i32_0 = arith.constant 0 : i32
    %c0_i32_1 = arith.constant 0 : i32
    return %c0_i32, %c0_i32_0 : i32, i32
  }
  func.func @transform_6(%arg0: i32) -> (i32, i32) {
    %c0_i32 = arith.constant 0 : i32
    %c0_i32_0 = arith.constant 0 : i32
    %c0_i32_1 = arith.constant 0 : i32
    return %c0_i32, %c0_i32_0 : i32, i32
  }
  func.func @transform_7(%arg0: i32) -> (i32, i32) {
    %c0_i32 = arith.constant 0 : i32
    %c0_i32_0 = arith.constant 0 : i32
    return %arg0, %c0_i32 : i32, i32
  }
}

</mosaic_0001>

<llo_original>
// kernel: tpu_custom_call.1
$region0: #{tpu_custom_call.1}
  #allocation0 [shape = 'u32[]', space=smem, size = 0x4, offset = 0x4, fixed_abs, tag = 'smem constant byte address 0x4 - core index']
  #allocation1 [shape = 'u32[72,128]{1,0:T(1,128)}', space=vmem, size = 0x9000, scoped, tag = 'internal scratch']
  %s0 = inlined_call_operand.hbm [shape: bf16[8,16], index: 0, kind: input, shape index: {}]
  %s1 = inlined_call_operand.hbm [shape: bf16[16,256], index: 1, kind: input, shape index: {}]
  %s2 = inlined_call_operand.hbm [shape: f32[1,256], index: 2, kind: input, shape index: {}]
  %s3 = inlined_call_operand.hbm [shape: bf16[128,128], index: 3, kind: input, shape index: {}]
  %s4 = inlined_call_operand.vmem [shape: f32[1,128], index: 4, kind: input, shape index: {}]
  %s5 = inlined_call_operand.hbm [shape: bf16[128,128], index: 5, kind: input, shape index: {}]
  %s6 = inlined_call_operand.vmem [shape: f32[1,128], index: 6, kind: input, shape index: {}]
  %s7 = inlined_call_operand.hbm [shape: f32[8,128], index: 7, kind: output, shape index: {}]
  %s8 = sld [smem:[#allocation0]]
  $region58: #{tpu_custom_call.1} parent=0
    _
  %s10 = ssub.s32 1, %s8
  %s11 = scalar_select 0, %s10, %s8
  $region1: #{tpu_custom_call.1} parent=0
    #allocation2 [shape = 'u8[2048]{0}', space=vmem, size = 0x800, scoped, tag = 'input window, operand 0, single buffered']
    #allocation3 [shape = 's32[1]{0}', space=sflag, size = 0x4, scoped, tag = 'scoped memory for tpu_custom_call.1']
    #allocation4 [shape = 's32[1]{0}', space=sflag, size = 0x4, scoped, tag = 'scoped memory for tpu_custom_call.1']
    #allocation5 [shape = 'u8[8192]{0}', space=vmem, size = 0x2000, scoped, tag = 'input window, operand 1, single buffered']
    #allocation6 [shape = 's32[1]{0}', space=sflag, size = 0x4, scoped, tag = 'scoped memory for tpu_custom_call.1']
    #allocation7 [shape = 'u8[1024]{0}', space=vmem, size = 0x400, scoped, tag = 'input window, operand 2, single buffered']
    #allocation8 [shape = 'u8[32768]{0}', space=vmem, size = 0x8000, scoped, tag = 'input window, operand 3, single buffered']
    #allocation9 [shape = 's32[1]{0}', space=sflag, size = 0x4, scoped, tag = 'scoped memory for tpu_custom_call.1']
    #allocation10 [shape = 'u8[32768]{0}', space=vmem, size = 0x8000, scoped, tag = 'input window, operand 5, single buffered']
    #allocation11 [shape = 'u8[4096]{0}', space=vmem, size = 0x1000, scoped, tag = 'output window, operand 0, single buffered']
    %12 = vsyncpa [#allocation3], 0
    %13 = vsyncpa [#allocation6], 0
    %14 = vsyncpa [#allocation9], 0
    %15 = vsyncpa [#allocation4], 0
    // Predicated region
    $region2: #{tpu_custom_call.1} parent=1 // pred_check
      _
    $region3: #{tpu_custom_call.1} parent=1 // pred_check_branch
      %17 = sbr.rel (0) target = $region5
    $region4: #{tpu_custom_call.1} parent=1 // pred_region
      %19 = vsyncadd [#allocation3], 0
      %s21 = sshll.u32 %s0, 4
      %s22 = int_to_ptr.hbm [resolvable:$true] %s21
      %s23 = sshll.u32 [#allocation2], 4
      %s24 = int_to_ptr.vmem [resolvable:$true] %s23
      %26 = dma.hbm_to_vmem [thread:$0]  %s22, 64, %s24, [#allocation3]
    $region5: #{tpu_custom_call.1} parent=1 // pred_fallthru
      _
    // Predicated region
    $region6: #{tpu_custom_call.1} parent=1 // pred_check
      _
    $region7: #{tpu_custom_call.1} parent=1 // pred_check_branch
      %28 = sbr.rel (0) target = $region9
    $region8: #{tpu_custom_call.1} parent=1 // pred_region
      %30 = vsyncadd [#allocation6], 0
      %s31 = sshll.u32 %s1, 4
      %s32 = int_to_ptr.hbm [resolvable:$true] %s31
      %s33 = sshll.u32 [#allocation5], 4
      %s34 = int_to_ptr.vmem [resolvable:$true] %s33
      %39 = dma.hbm_to_vmem [thread:$0]  %s32, 256, %s34, [#allocation6], 128, 128, 8
    $region9: #{tpu_custom_call.1} parent=1 // pred_fallthru
      _
    // Predicated region
    $region10: #{tpu_custom_call.1} parent=1 // pred_check
      _
    $region11: #{tpu_custom_call.1} parent=1 // pred_check_branch
      %41 = sbr.rel (0) target = $region13
    $region12: #{tpu_custom_call.1} parent=1 // pred_region
      %43 = vsyncadd [#allocation6], 0
      %s45 = sshll.u32 %s2, 4
      %s46 = int_to_ptr.hbm [resolvable:$true] %s45
      %s47 = sshll.u32 [#allocation7], 4
      %s48 = int_to_ptr.vmem [resolvable:$true] %s47
      %50 = dma.hbm_to_vmem [thread:$0]  %s46, 32, %s48, [#allocation6]
    $region13: #{tpu_custom_call.1} parent=1 // pred_fallthru
      _
    // Predicated region
    $region14: #{tpu_custom_call.1} parent=1 // pred_check
      _
    $region15: #{tpu_custom_call.1} parent=1 // pred_check_branch
      %52 = sbr.rel (0) target = $region17
    $region16: #{tpu_custom_call.1} parent=1 // pred_region
      %54 = vsyncadd [#allocation9], 0
      %s55 = sshll.u32 %s3, 4
      %s56 = int_to_ptr.hbm [resolvable:$true] %s55
      %s57 = sshll.u32 [#allocation8], 4
      %s58 = int_to_ptr.vmem [resolvable:$true] %s57
      %63 = dma.hbm_to_vmem [thread:$0]  %s56, 1024, %s58, [#allocation9], 64, 64, 4
    $region17: #{tpu_custom_call.1} parent=1 // pred_fallthru
      _
    // Predicated region
    $region18: #{tpu_custom_call.1} parent=1 // pred_check
      _
    $region19: #{tpu_custom_call.1} parent=1 // pred_check_branch
      %65 = sbr.rel (0) target = $region21
    $region20: #{tpu_custom_call.1} parent=1 // pred_region
      _
    $region21: #{tpu_custom_call.1} parent=1 // pred_fallthru
      _
    // Predicated region
    $region22: #{tpu_custom_call.1} parent=1 // pred_check
      _
    $region23: #{tpu_custom_call.1} parent=1 // pred_check_branch
      %67 = sbr.rel (0) target = $region25
    $region24: #{tpu_custom_call.1} parent=1 // pred_region
      %69 = vsyncadd [#allocation9], 0
      %s70 = sshll.u32 %s5, 4
      %s71 = int_to_ptr.hbm [resolvable:$true] %s70
      %s72 = sshll.u32 [#allocation10], 4
      %s73 = int_to_ptr.vmem [resolvable:$true] %s72
      %78 = dma.hbm_to_vmem [thread:$0]  %s71, 1024, %s73, [#allocation9], 64, 64, 4
    $region25: #{tpu_custom_call.1} parent=1 // pred_fallthru
      _
    // Predicated region
    $region26: #{tpu_custom_call.1} parent=1 // pred_check
      _
    $region27: #{tpu_custom_call.1} parent=1 // pred_check_branch
      %80 = sbr.rel (0) target = $region29
    $region28: #{tpu_custom_call.1} parent=1 // pred_region
      _
    $region29: #{tpu_custom_call.1} parent=1 // pred_fallthru
      _
    // Predicated region
    $region30: #{tpu_custom_call.1} parent=1 // pred_check
      _
    $region31: #{tpu_custom_call.1} parent=1 // pred_check_branch
      %82 = sbr.rel (0) target = $region33
    $region32: #{tpu_custom_call.1} parent=1 // pred_region
      %84 = dma.done [#allocation3], 64
    $region33: #{tpu_custom_call.1} parent=1 // pred_fallthru
      _
    // Predicated region
    $region34: #{tpu_custom_call.1} parent=1 // pred_check
      _
    $region35: #{tpu_custom_call.1} parent=1 // pred_check_branch
      %86 = sbr.rel (0) target = $region37
    $region36: #{tpu_custom_call.1} parent=1 // pred_region
      %88 = dma.done [#allocation6], 256
    $region37: #{tpu_custom_call.1} parent=1 // pred_fallthru
      _
    // Predicated region
    $region38: #{tpu_custom_call.1} parent=1 // pred_check
      _
    $region39: #{tpu_custom_call.1} parent=1 // pred_check_branch
      %90 = sbr.rel (0) target = $region41
    $region40: #{tpu_custom_call.1} parent=1 // pred_region
      %92 = dma.done [#allocation6], 32
    $region41: #{tpu_custom_call.1} parent=1 // pred_fallthru
      _
    // Predicated region
    $region42: #{tpu_custom_call.1} parent=1 // pred_check
      _
    $region43: #{tpu_custom_call.1} parent=1 // pred_check_branch
      %94 = sbr.rel (0) target = $region45
    $region44: #{tpu_custom_call.1} parent=1 // pred_region
      %96 = dma.done [#allocation9], 1024
    $region45: #{tpu_custom_call.1} parent=1 // pred_fallthru
      _
    // Predicated region
    $region46: #{tpu_custom_call.1} parent=1 // pred_check
      _
    $region47: #{tpu_custom_call.1} parent=1 // pred_check_branch
      %98 = sbr.rel (0) target = $region49
    $region48: #{tpu_custom_call.1} parent=1 // pred_region
      %100 = dma.done [#allocation9], 1024
    $region49: #{tpu_custom_call.1} parent=1 // pred_fallthru
      _
    %v102 = vld [vmem:[#allocation2] sm:$0xf]
    %v103 = vld [vmem:[#allocation5] sm:$0xff]
    %v104 = vld [vmem:[#allocation5 + $0x8] sm:$0xff]
    %v105 = vld [vmem:[#allocation7] sm:$0x3]
    %v107 = vperm.slane %v105, 0
    %v108 = vperm.slane %v105, 1
    %v113 = vunpack.c.l.b16 %v103
    %v114 = vunpack.c.h.b16 %v103
    %v115 = vunpack.c.l.b16 %v104
    %v116 = vunpack.c.h.b16 %v104
    %v117 = vpack.c.b16 %v115, %v113
    %v118 = vpack.c.b16 %v116, %v114
    %vm121 = vcmask 130048
    %v123 = vsel %vm121, %v102, 0
    %125 = vmatpush.bf16.msra.mxu0 0
    %126 = vmatpush.bf16.msra.mxu0 0
    %127 = vmatpush.bf16.msra.mxu0 0
    %128 = vmatpush.bf16.msra.mxu0 0
    %129 = vmatpush.bf16.msra.mxu0 0
    %130 = vmatpush.bf16.msra.mxu0 0
    %131 = vmatpush.bf16.msra.mxu0 0
    %132 = vmatpush.bf16.msra.mxu0 %v117
    %133 = vmatmul.bf16.gmra.mxu0 %v123
    %v134 = vpop.f32.mrf.mxu0
    %v135 = vadd.f32 %v107, %v134
    %v136 = vpop.f32.mrf.mxu0
    %137 = vdwg.mxu0
    %138 = vmatpush.bf16.msra.mxu0 0
    %139 = vmatpush.bf16.msra.mxu0 0
    %140 = vmatpush.bf16.msra.mxu0 0
    %141 = vmatpush.bf16.msra.mxu0 0
    %142 = vmatpush.bf16.msra.mxu0 0
    %143 = vmatpush.bf16.msra.mxu0 0
    %144 = vmatpush.bf16.msra.mxu0 0
    %145 = vmatpush.bf16.msra.mxu0 %v118
    %146 = vmatmul.bf16.gmra.mxu0 %v123
    %v147 = vpop.f32.mrf.mxu0
    %v148 = vadd.f32 %v108, %v147
    %v149 = vpop.f32.mrf.mxu0
    %150 = vdwg.mxu0
    %v151 = vmax.f32 %v135, 0.0
    %v152 = vmax.f32 %v148, 0.0
    %v153 = vadd.f32 %v151, %v152
    %v154 = vpack.c.bf16 %v153, %v153
    %v155 = vld [vmem:[#allocation8] sm:$0xf]
    %v156 = vld [vmem:[#allocation8 + $0x4] sm:$0xf]
    %v157 = vld [vmem:[#allocation8 + $0x8] sm:$0xf]
    %v158 = vld [vmem:[#allocation8 + $0xc] sm:$0xf]
    %v159 = vld [vmem:[#allocation8 + $0x10] sm:$0xf]
    %v160 = vld [vmem:[#allocation8 + $0x14] sm:$0xf]
    %v161 = vld [vmem:[#allocation8 + $0x18] sm:$0xf]
    %v162 = vld [vmem:[#allocation8 + $0x1c] sm:$0xf]
    %v163 = vld [vmem:[#allocation8 + $0x20] sm:$0xf]
    %v164 = vld [vmem:[#allocation8 + $0x24] sm:$0xf]
    %v165 = vld [vmem:[#allocation8 + $0x28] sm:$0xf]
    %v166 = vld [vmem:[#allocation8 + $0x2c] sm:$0xf]
    %v167 = vld [vmem:[#allocation8 + $0x30] sm:$0xf]
    %v168 = vld [vmem:[#allocation8 + $0x34] sm:$0xf]
    %v169 = vld [vmem:[#allocation8 + $0x38] sm:$0xf]
    %v170 = vld [vmem:[#allocation8 + $0x3c] sm:$0xf]
    %v171 = vld [vmem:[%s4] sm:$0x1]
    %v173 = vperm.slane %v171, 0
    %v191 = vunpack.c.l.b16 %v155
    %v192 = vunpack.c.l.b16 %v156
    %v193 = vunpack.c.l.b16 %v157
    %v194 = vunpack.c.l.b16 %v158
    %v195 = vunpack.c.l.b16 %v159
    %v196 = vunpack.c.l.b16 %v160
    %v197 = vunpack.c.l.b16 %v161
    %v198 = vunpack.c.l.b16 %v162
    %v199 = vunpack.c.l.b16 %v163
    %v200 = vunpack.c.l.b16 %v164
    %v201 = vunpack.c.l.b16 %v165
    %v202 = vunpack.c.l.b16 %v166
    %v203 = vunpack.c.l.b16 %v167
    %v204 = vunpack.c.l.b16 %v168
    %v205 = vunpack.c.l.b16 %v169
    %v206 = vunpack.c.l.b16 %v170
    %v207 = vpack.c.b16 %v192, %v191
    %v208 = vpack.c.b16 %v194, %v193
    %v209 = vpack.c.b16 %v196, %v195
    %v210 = vpack.c.b16 %v198, %v197
    %v211 = vpack.c.b16 %v200, %v199
    %v212 = vpack.c.b16 %v202, %v201
    %v213 = vpack.c.b16 %v204, %v203
    %v214 = vpack.c.b16 %v206, %v205
    %223 = vmatpush.bf16.msra.mxu0 %v214
    %224 = vmatpush.bf16.msra.mxu0 %v213
    %225 = vmatpush.bf16.msra.mxu0 %v212
    %226 = vmatpush.bf16.msra.mxu0 %v211
    %227 = vmatpush.bf16.msra.mxu0 %v210
    %228 = vmatpush.bf16.msra.mxu0 %v209
    %229 = vmatpush.bf16.msra.mxu0 %v208
    %230 = vmatpush.bf16.msra.mxu0 %v207
    %231 = vmatmul.bf16.gmra.mxu0 %v154
    %v232 = vpop.f32.mrf.mxu0
    %v233 = vadd.f32 %v173, %v232
    %v234 = vpop.f32.mrf.mxu0
    %235 = vdwg.mxu0
    %v236 = vmax.f32 %v233, 0.0
    %v237 = vpack.c.bf16 %v236, %v236
    %v238 = vld [vmem:[#allocation10] sm:$0xf]
    %v239 = vld [vmem:[#allocation10 + $0x4] sm:$0xf]
    %v240 = vld [vmem:[#allocation10 + $0x8] sm:$0xf]
    %v241 = vld [vmem:[#allocation10 + $0xc] sm:$0xf]
    %v242 = vld [vmem:[#allocation10 + $0x10] sm:$0xf]
    %v243 = vld [vmem:[#allocation10 + $0x14] sm:$0xf]
    %v244 = vld [vmem:[#allocation10 + $0x18] sm:$0xf]
    %v245 = vld [vmem:[#allocation10 + $0x1c] sm:$0xf]
    %v246 = vld [vmem:[#allocation10 + $0x20] sm:$0xf]
    %v247 = vld [vmem:[#allocation10 + $0x24] sm:$0xf]
    %v248 = vld [vmem:[#allocation10 + $0x28] sm:$0xf]
    %v249 = vld [vmem:[#allocation10 + $0x2c] sm:$0xf]
    %v250 = vld [vmem:[#allocation10 + $0x30] sm:$0xf]
    %v251 = vld [vmem:[#allocation10 + $0x34] sm:$0xf]
    %v252 = vld [vmem:[#allocation10 + $0x38] sm:$0xf]
    %v253 = vld [vmem:[#allocation10 + $0x3c] sm:$0xf]
    %v254 = vld [vmem:[%s6] sm:$0x1]
    %v256 = vperm.slane %v254, 0
    %v274 = vunpack.c.l.b16 %v238
    %v275 = vunpack.c.l.b16 %v239
    %v276 = vunpack.c.l.b16 %v240
    %v277 = vunpack.c.l.b16 %v241
    %v278 = vunpack.c.l.b16 %v242
    %v279 = vunpack.c.l.b16 %v243
    %v280 = vunpack.c.l.b16 %v244
    %v281 = vunpack.c.l.b16 %v245
    %v282 = vunpack.c.l.b16 %v246
    %v283 = vunpack.c.l.b16 %v247
    %v284 = vunpack.c.l.b16 %v248
    %v285 = vunpack.c.l.b16 %v249
    %v286 = vunpack.c.l.b16 %v250
    %v287 = vunpack.c.l.b16 %v251
    %v288 = vunpack.c.l.b16 %v252
    %v289 = vunpack.c.l.b16 %v253
    %v290 = vpack.c.b16 %v275, %v274
    %v291 = vpack.c.b16 %v277, %v276
    %v292 = vpack.c.b16 %v279, %v278
    %v293 = vpack.c.b16 %v281, %v280
    %v294 = vpack.c.b16 %v283, %v282
    %v295 = vpack.c.b16 %v285, %v284
    %v296 = vpack.c.b16 %v287, %v286
    %v297 = vpack.c.b16 %v289, %v288
    %306 = vmatpush.bf16.msra.mxu0 %v297
    %307 = vmatpush.bf16.msra.mxu0 %v296
    %308 = vmatpush.bf16.msra.mxu0 %v295
    %309 = vmatpush.bf16.msra.mxu0 %v294
    %310 = vmatpush.bf16.msra.mxu0 %v293
    %311 = vmatpush.bf16.msra.mxu0 %v292
    %312 = vmatpush.bf16.msra.mxu0 %v291
    %313 = vmatpush.bf16.msra.mxu0 %v290
    %314 = vmatmul.bf16.gmra.mxu0 %v237
    %v315 = vpop.f32.mrf.mxu0
    %v316 = vadd.f32 %v256, %v315
    %v317 = vpop.f32.mrf.mxu0
    %318 = vdwg.mxu0
    %319 = vst [vmem:[#allocation11] sm:$0xff] %v316
    // Predicated region
    $region50: #{tpu_custom_call.1} parent=1 // pred_check
      _
    $region51: #{tpu_custom_call.1} parent=1 // pred_check_branch
      %321 = sbr.rel (0) target = $region53
    $region52: #{tpu_custom_call.1} parent=1 // pred_region
      %323 = vsyncadd [#allocation4], 0
      %s325 = sshll.u32 [#allocation11], 4
      %s326 = int_to_ptr.vmem [resolvable:$true] %s325
      %s327 = sshll.u32 %s7, 4
      %s328 = int_to_ptr.hbm [resolvable:$true] %s327
      %330 = dma.vmem_to_hbm [thread:$0]  %s326, 128, %s328, [#allocation4]
    $region53: #{tpu_custom_call.1} parent=1 // pred_fallthru
      _
    // Predicated region
    $region54: #{tpu_custom_call.1} parent=1 // pred_check
      _
    $region55: #{tpu_custom_call.1} parent=1 // pred_check_branch
      %332 = sbr.rel (0) target = $region57
    $region56: #{tpu_custom_call.1} parent=1 // pred_region
      %334 = dma.done [#allocation4], 128
    $region57: #{tpu_custom_call.1} parent=1 // pred_fallthru
      _
    %335 = vsyncpa [#allocation3], 1
    %336 = vsyncpa [#allocation6], 1
    %337 = vsyncpa [#allocation9], 1
    %338 = vsyncpa [#allocation4], 1

</llo_original>
